<compile_context>
chip_gen: v7x
topology: tpu7x:2x2x1
jax: 0.10.0
libtpu: 0.0.40
codegen_flags: <defaults>
</compile_context>

<pallas_src>
import functools
import math

import jax
import jax.numpy as jnp
from jax.experimental import pallas as pl
from jax.experimental.pallas import tpu as pltpu

S = 2  # torch.stack((mod1, mod2), dim=1)

_VMEM_BUDGET = 20 * 1024 * 1024          # conservative: fits v5e/v6e/v7x
_VMEM_LIMIT = 32 * 1024 * 1024           # raise v5e's 16 MiB scoped default


def _round_up(x, m):
    return (x + m - 1) // m * m


def _pick_batch_tile(b, din, dpad):
    """Rows per grid step, sized from the per-step VMEM footprint."""
    # fixed: fused weight + bias, double-buffered f32
    fixed = 8 * din * 3 * dpad + 8 * 3 * dpad
    # per batch row (f32 bytes): input block (2 rows/batch-row, double-buffered),
    # output block (2*dpad lanes, double-buffered), projection intermediate,
    # q/k/v/dq/out temporaries (slack).
    per_row = 4 * (2 * 2 * din + 2 * 2 * dpad + 2 * 3 * dpad + 8 * dpad)
    cap = max(8, ((_VMEM_BUDGET - fixed) // per_row) // 8 * 8)
    tb = min(_round_up(b, 8), cap, 4096)
    return max(8, tb)


def _sigmoid(x):
    """Numerically stable logistic using only exp / reciprocal / select."""
    z = jnp.exp(-jnp.abs(x))
    r = pl.reciprocal(1.0 + z, approx=False)
    return jnp.where(x >= 0, r, z * r)


def _attn_bi_kernel(x_ref, w_ref, b_ref, o_ref, *, tb, dpad):
    # x_ref: (2*tb, din)  rows [0:tb] = mod1 tile, rows [tb:2*tb] = mod2 tile
    # w_ref: (din, 3*dpad) fused [WQ*inv_root | WK | WV], each padded to 128 lanes
    # b_ref: (1, 3*dpad)
    # o_ref: (tb, 2*dpad)  lanes [0:dpad] = out_mod1, [dpad:2*dpad] = out_mod2
    p = jnp.dot(x_ref[...], w_ref[...],
                preferred_element_type=jnp.float32) + b_ref[...]  # (2*tb, 3*dpad)
    p1 = p[:tb]
    p2 = p[tb:]

    # 128-lane-aligned free views.
    q1, k1, v1 = p1[:, :dpad], p1[:, dpad:2 * dpad], p1[:, 2 * dpad:]
    q2, k2, v2 = p2[:, :dpad], p2[:, dpad:2 * dpad], p2[:, 2 * dpad:]

    # torch Softmax(dim=1) over the 2x2 score matrix normalizes over the query
    # axis (per key column).  For 2 entries that is exactly a sigmoid of the
    # score difference; 1/sqrt(dim_out) is already folded into WQ.
    dq = q1 - q2                                               # (tb, dpad)
    a11 = _sigmoid(jnp.sum(dq * k1, axis=1, keepdims=True))    # (tb, 1)
    a12 = _sigmoid(jnp.sum(dq * k2, axis=1, keepdims=True))
    a21 = 1.0 - a11
    a22 = 1.0 - a12

    # out[b, 0, :] = a11*V1 + a12*V2 ; out[b, 1, :] = a21*V1 + a22*V2
    o_ref[:, :dpad] = a11 * v1 + a12 * v2
    o_ref[:, dpad:] = a21 * v1 + a22 * v2


def fuse_qkv_params(params, dim_out):
    """Build the fused, lane-padded (Din, 3*Dpad) weight and (1, 3*Dpad) bias.

    Call once (outside the hot path); 1/sqrt(dim_out) is folded into WQ/bQ.
    """
    wq, bq, wk, bk, wv, bv = params
    dpad = _round_up(dim_out, 128)
    inv_root = 1.0 / math.sqrt(dim_out)

    def pad_w(w):
        return jnp.pad(w.astype(jnp.float32), ((0, 0), (0, dpad - dim_out)))

    def pad_b(b):
        return jnp.pad(b.astype(jnp.float32), (0, dpad - dim_out))

    w_fused = jnp.concatenate(
        [pad_w(wq) * inv_root, pad_w(wk), pad_w(wv)], axis=1)           # (Din, 3*Dpad)
    b_fused = jnp.concatenate(
        [pad_b(bq) * inv_root, pad_b(bk), pad_b(bv)]).reshape(1, 3 * dpad)
    return w_fused, b_fused


def self_attention_bi(mod1, mod2, w_fused, b_fused, dim_out):
    """Fused SelfAttentionBi forward.  Returns (B, 2, dim_out)."""
    B, din = mod1.shape
    dpad = w_fused.shape[1] // 3

    tb = _pick_batch_tile(B, din, dpad)
    nsteps = pl.cdiv(B, tb)
    if nsteps > 1 and nsteps % 2 == 1:
        nsteps += 1          # even step count -> balanced v7x megacore split
    bp = nsteps * tb

    mod1 = mod1.astype(jnp.float32)
    mod2 = mod2.astype(jnp.float32)
    if bp != B:
        pad = bp - B
        mod1 = jnp.pad(mod1, ((0, pad), (0, 0)))
        mod2 = jnp.pad(mod2, ((0, pad), (0, 0)))

    # Interleave the two modalities per batch tile so each grid step reads one
    # contiguous (2*tb, din) slab and does a single tall MXU matmul.
    x = jnp.stack(
        [mod1.reshape(nsteps, tb, din), mod2.reshape(nsteps, tb, din)],
        axis=1).reshape(nsteps * 2 * tb, din)

    kernel = functools.partial(_attn_bi_kernel, tb=tb, dpad=dpad)

    x_spec = pl.BlockSpec((2 * tb, din), lambda i: (i, 0))
    w_spec = pl.BlockSpec((din, 3 * dpad), lambda i: (0, 0))
    bias_spec = pl.BlockSpec((1, 3 * dpad), lambda i: (0, 0))
    o_spec = pl.BlockSpec((tb, 2 * dpad), lambda i: (i, 0))

    # Advisory cost estimate for the XLA scheduler.
    flops = 2 * (2 * bp) * din * (3 * dpad) + 12 * bp * dpad
    transcendentals = 2 * bp
    bytes_accessed = 4 * (2 * bp * din + din * 3 * dpad + 3 * dpad
                          + bp * 2 * dpad)
    cost = pl.CostEstimate(flops=flops, transcendentals=transcendentals,
                           bytes_accessed=bytes_accessed)

    out = pl.pallas_call(
        kernel,
        out_shape=jax.ShapeDtypeStruct((bp, 2 * dpad), jnp.float32),
        grid_spec=pltpu.PrefetchScalarGridSpec(
            num_scalar_prefetch=0,
            grid=(nsteps,),
            in_specs=[x_spec, w_spec, bias_spec],
            out_specs=o_spec,
        ),
        compiler_params=pltpu.CompilerParams(
            dimension_semantics=("parallel",),
            vmem_limit_bytes=_VMEM_LIMIT,
        ),
        cost_estimate=cost,
    )(x, w_fused, b_fused)

    # (bp, 2*dpad) -> (B, 2, dim_out); contiguous reshape + cheap slice.
    return out.reshape(bp, 2, dpad)[:B, :, :dim_out]


def _reference(mod1, mod2, params, dim_out):
    wq, bq, wk, bk, wv, bv = params
    x = jnp.stack((mod1, mod2), axis=1)                     # (B, 2, Din)
    Q = x @ wq + bq
    K = x @ wk + bk
    V = x @ wv + bv
    QK = jnp.einsum("bse,bte->bst", Q, K) / math.sqrt(dim_out)
    attn = jax.nn.softmax(QK, axis=1)                       # torch Softmax(dim=1)
    return jnp.einsum("bst,btd->bsd", attn, V)


if __name__ == "__main__":
    # Small shapes consistent with the module: features from the two ViT
    # extractors are (B, feature_size); SelfAttentionBi(dim_in=feature_size,
    # dim_out).  B=30 also exercises the batch-padding path.
    B, dim_in, dim_out = 30, 16, 32

    key = jax.random.PRNGKey(0)
    k1, k2, kwq, kbq, kwk, kbk, kwv, kbv = jax.random.split(key, 8)

    mod1 = jax.random.normal(k1, (B, dim_in), dtype=jnp.float32)
    mod2 = jax.random.normal(k2, (B, dim_in), dtype=jnp.float32)

    # Deterministic synthetic Linear parameters (nn.Linear default init range).
    bound = 1.0 / math.sqrt(dim_in)
    WQ = jax.random.uniform(kwq, (dim_in, dim_out), minval=-bound, maxval=bound,
                            dtype=jnp.float32)
    bQ = jax.random.uniform(kbq, (dim_out,), minval=-bound, maxval=bound,
                            dtype=jnp.float32)
    WK = jax.random.uniform(kwk, (dim_in, dim_out), minval=-bound, maxval=bound,
                            dtype=jnp.float32)
    bK = jax.random.uniform(kbk, (dim_out,), minval=-bound, maxval=bound,
                            dtype=jnp.float32)
    WV = jax.random.uniform(kwv, (dim_in, dim_out), minval=-bound, maxval=bound,
                            dtype=jnp.float32)
    bV = jax.random.uniform(kbv, (dim_out,), minval=-bound, maxval=bound,
                            dtype=jnp.float32)
    params = (WQ, bQ, WK, bK, WV, bV)

    # Fused / padded weights built once, outside the per-call wrapper.
    w_fused, b_fused = fuse_qkv_params(params, dim_out)

    fn = jax.jit(self_attention_bi, static_argnames=("dim_out",))
    out = fn(mod1, mod2, w_fused, b_fused, dim_out=dim_out)
    out = jax.block_until_ready(out)

    ref = _reference(mod1, mod2, params, dim_out)
    assert out.shape == (B, S, dim_out), out.shape
    assert jnp.allclose(out, ref, atol=2e-5, rtol=1e-4), "mismatch vs JAX reference"

    print("KERNEL_OK")
</pallas_src>

<mosaic_0001>
module attributes {stable_mosaic.version = 11 : i64} {
  func.func @_attn_bi_kernel(%arg0: i32, %arg1: memref<64x16xf32, #tpu.memory_space<vmem>>, %arg2: memref<16x384xf32, #tpu.memory_space<vmem>>, %arg3: memref<1x384xf32, #tpu.memory_space<vmem>>, %arg4: memref<32x256xf32, #tpu.memory_space<vmem>>) attributes {dimension_semantics = [#tpu.dimension_semantics<parallel>], iteration_bounds = array<i64: 1>, scalar_prefetch = 0 : i64, scratch_operands = 0 : i64, tpu.core_type = #tpu.core_type<tc>, window_params = [{transform_indices = @transform_0, window_bounds = array<i64: 64, 16>}, {pipeline_mode = #tpu.pipeline_mode<synchronous>, transform_indices = @transform_1, window_bounds = array<i64: 16, 384>}, {pipeline_mode = #tpu.pipeline_mode<synchronous>, transform_indices = @transform_2, window_bounds = array<i64: 1, 384>}, {transform_indices = @transform_3, window_bounds = array<i64: 32, 256>}]} {
    %c0 = arith.constant 0 : index
    %c0_0 = arith.constant 0 : index
    %0 = vector.load %arg1[%c0, %c0_0] : memref<64x16xf32, #tpu.memory_space<vmem>>, vector<64x16xf32>
    %c0_1 = arith.constant 0 : index
    %c0_2 = arith.constant 0 : index
    %1 = vector.load %arg2[%c0_1, %c0_2] : memref<16x384xf32, #tpu.memory_space<vmem>>, vector<16x384xf32>
    %cst = arith.constant dense<0.000000e+00> : vector<64x384xf32>
    %2 = tpu.matmul %0, %1, %cst {dimension_numbers = #tpu.dot_dimension_numbers<[1], [0], [0], [1], [0, 0, 1, 1], [], []>} : vector<64x16xf32>, vector<16x384xf32>, vector<64x384xf32> -> vector<64x384xf32>
    %c0_3 = arith.constant 0 : index
    %c0_4 = arith.constant 0 : index
    %3 = vector.load %arg3[%c0_3, %c0_4] : memref<1x384xf32, #tpu.memory_space<vmem>>, vector<1x384xf32>
    %4 = vector.broadcast %3 : vector<1x384xf32> to vector<64x384xf32>
    %5 = arith.addf %2, %4 : vector<64x384xf32>
    %6 = vector.extract_strided_slice %5 {offsets = [0, 0], sizes = [32, 384], strides = [1, 1]} : vector<64x384xf32> to vector<32x384xf32>
    %7 = vector.extract_strided_slice %5 {offsets = [32, 0], sizes = [32, 384], strides = [1, 1]} : vector<64x384xf32> to vector<32x384xf32>
    %8 = vector.extract_strided_slice %6 {offsets = [0, 0], sizes = [32, 128], strides = [1, 1]} : vector<32x384xf32> to vector<32x128xf32>
    %9 = vector.extract_strided_slice %6 {offsets = [0, 128], sizes = [32, 128], strides = [1, 1]} : vector<32x384xf32> to vector<32x128xf32>
    %10 = vector.extract_strided_slice %6 {offsets = [0, 256], sizes = [32, 128], strides = [1, 1]} : vector<32x384xf32> to vector<32x128xf32>
    %11 = vector.extract_strided_slice %7 {offsets = [0, 0], sizes = [32, 128], strides = [1, 1]} : vector<32x384xf32> to vector<32x128xf32>
    %12 = vector.extract_strided_slice %7 {offsets = [0, 128], sizes = [32, 128], strides = [1, 1]} : vector<32x384xf32> to vector<32x128xf32>
    %13 = vector.extract_strided_slice %7 {offsets = [0, 256], sizes = [32, 128], strides = [1, 1]} : vector<32x384xf32> to vector<32x128xf32>
    %14 = arith.subf %8, %11 : vector<32x128xf32>
    %15 = arith.mulf %14, %9 : vector<32x128xf32>
    %cst_5 = arith.constant dense<0.000000e+00> : vector<32xf32>
    %16 = vector.multi_reduction <add>, %15, %cst_5 [1] : vector<32x128xf32> to vector<32xf32>
    %17 = vector.shape_cast %16 : vector<32xf32> to vector<32x1xf32>
    %18 = math.absf %17 : vector<32x1xf32>
    %cst_6 = arith.constant 0.000000e+00 : f32
    %19 = vector.broadcast %cst_6 : f32 to vector<32x1xf32>
    %20 = arith.subf %19, %18 : vector<32x1xf32>
    %21 = math.exp %20 : vector<32x1xf32>
    %cst_7 = arith.constant 1.000000e+00 : f32
    %22 = vector.broadcast %cst_7 : f32 to vector<32x1xf32>
    %23 = arith.addf %22, %21 : vector<32x1xf32>
    %24 = tpu.reciprocal %23 : vector<32x1xf32> -> vector<32x1xf32>
    %cst_8 = arith.constant 0.000000e+00 : f32
    %25 = vector.broadcast %cst_8 : f32 to vector<32x1xf32>
    %26 = arith.cmpf oge, %17, %25 : vector<32x1xf32>
    %27 = arith.mulf %21, %24 : vector<32x1xf32>
    %28 = arith.select %26, %24, %27 : vector<32x1xi1>, vector<32x1xf32>
    %29 = arith.mulf %14, %12 : vector<32x128xf32>
    %cst_9 = arith.constant dense<0.000000e+00> : vector<32xf32>
    %30 = vector.multi_reduction <add>, %29, %cst_9 [1] : vector<32x128xf32> to vector<32xf32>
    %31 = vector.shape_cast %30 : vector<32xf32> to vector<32x1xf32>
    %32 = math.absf %31 : vector<32x1xf32>
    %cst_10 = arith.constant 0.000000e+00 : f32
    %33 = vector.broadcast %cst_10 : f32 to vector<32x1xf32>
    %34 = arith.subf %33, %32 : vector<32x1xf32>
    %35 = math.exp %34 : vector<32x1xf32>
    %cst_11 = arith.constant 1.000000e+00 : f32
    %36 = vector.broadcast %cst_11 : f32 to vector<32x1xf32>
    %37 = arith.addf %36, %35 : vector<32x1xf32>
    %38 = tpu.reciprocal %37 : vector<32x1xf32> -> vector<32x1xf32>
    %cst_12 = arith.constant 0.000000e+00 : f32
    %39 = vector.broadcast %cst_12 : f32 to vector<32x1xf32>
    %40 = arith.cmpf oge, %31, %39 : vector<32x1xf32>
    %41 = arith.mulf %35, %38 : vector<32x1xf32>
    %42 = arith.select %40, %38, %41 : vector<32x1xi1>, vector<32x1xf32>
    %cst_13 = arith.constant 1.000000e+00 : f32
    %43 = vector.broadcast %cst_13 : f32 to vector<32x1xf32>
    %44 = arith.subf %43, %28 : vector<32x1xf32>
    %cst_14 = arith.constant 1.000000e+00 : f32
    %45 = vector.broadcast %cst_14 : f32 to vector<32x1xf32>
    %46 = arith.subf %45, %42 : vector<32x1xf32>
    %47 = vector.broadcast %28 : vector<32x1xf32> to vector<32x128xf32>
    %48 = arith.mulf %47, %10 : vector<32x128xf32>
    %49 = vector.broadcast %42 : vector<32x1xf32> to vector<32x128xf32>
    %50 = arith.mulf %49, %13 : vector<32x128xf32>
    %51 = arith.addf %48, %50 : vector<32x128xf32>
    %c0_15 = arith.constant 0 : index
    %c0_16 = arith.constant 0 : index
    %52 = vector.load %arg4[%c0_15, %c0_16] : memref<32x256xf32, #tpu.memory_space<vmem>>, vector<32x128xf32>
    tpu.vector_store %arg4[%c0_15, %c0_16], %51 {strides = array<i32>} : memref<32x256xf32, #tpu.memory_space<vmem>>, vector<32x128xf32>,
    %53 = vector.broadcast %44 : vector<32x1xf32> to vector<32x128xf32>
    %54 = arith.mulf %53, %10 : vector<32x128xf32>
    %55 = vector.broadcast %46 : vector<32x1xf32> to vector<32x128xf32>
    %56 = arith.mulf %55, %13 : vector<32x128xf32>
    %57 = arith.addf %54, %56 : vector<32x128xf32>
    %c0_17 = arith.constant 0 : index
    %c128 = arith.constant 128 : index
    %58 = vector.load %arg4[%c0_17, %c128] : memref<32x256xf32, #tpu.memory_space<vmem>>, vector<32x128xf32>
    tpu.vector_store %arg4[%c0_17, %c128], %57 {strides = array<i32>} : memref<32x256xf32, #tpu.memory_space<vmem>>, vector<32x128xf32>,
    return
  }
  func.func @transform_0(%arg0: i32) -> (i32, i32) {
    %c0_i32 = arith.constant 0 : i32
    %c0_i32_0 = arith.constant 0 : i32
    return %arg0, %c0_i32 : i32, i32
  }
  func.func @transform_1(%arg0: i32) -> (i32, i32) {
    %c0_i32 = arith.constant 0 : i32
    %c0_i32_0 = arith.constant 0 : i32
    %c0_i32_1 = arith.constant 0 : i32
    return %c0_i32, %c0_i32_0 : i32, i32
  }
  func.func @transform_2(%arg0: i32) -> (i32, i32) {
    %c0_i32 = arith.constant 0 : i32
    %c0_i32_0 = arith.constant 0 : i32
    %c0_i32_1 = arith.constant 0 : i32
    return %c0_i32, %c0_i32_0 : i32, i32
  }
  func.func @transform_3(%arg0: i32) -> (i32, i32) {
    %c0_i32 = arith.constant 0 : i32
    %c0_i32_0 = arith.constant 0 : i32
    return %arg0, %c0_i32 : i32, i32
  }
}

</mosaic_0001>

<llo_original>
// kernel: self_attention_bi.1
$region0: #{self_attention_bi.1}
  #allocation0 [shape = 'u32[]', space=smem, size = 0x4, offset = 0x4, fixed_abs, tag = 'smem constant byte address 0x4 - core index']
  #allocation1 [shape = 'u32[144,128]{1,0:T(1,128)}', space=vmem, size = 0x12000, scoped, tag = 'internal scratch']
  %s0 = inlined_call_operand.vmem [shape: f32[64,16], index: 0, kind: input, shape index: {}]
  %s1 = inlined_call_operand.vmem [shape: f32[16,384], index: 1, kind: input, shape index: {}]
  %s2 = inlined_call_operand.vmem [shape: f32[1,384], index: 2, kind: input, shape index: {}]
  %s3 = inlined_call_operand.vmem [shape: f32[32,256], index: 3, kind: output, shape index: {}]
  %s4 = sld [smem:[#allocation0]]
  $region22: #{self_attention_bi.1} parent=0
    _
  %s6 = ssub.s32 1, %s4
  %s7 = scalar_select 0, %s6, %s4
  // Predicated region
  $region2: #{self_attention_bi.1} parent=0 // pred_check
    _
  $region3: #{self_attention_bi.1} parent=0 // pred_check_branch
    %9 = sbr.rel (0) target = $region5
  $region4: #{self_attention_bi.1} parent=0 // pred_region
    _
  $region5: #{self_attention_bi.1} parent=0 // pred_fallthru
    _
  // Predicated region
  $region6: #{self_attention_bi.1} parent=0 // pred_check
    _
  $region7: #{self_attention_bi.1} parent=0 // pred_check_branch
    %11 = sbr.rel (0) target = $region9
  $region8: #{self_attention_bi.1} parent=0 // pred_region
    _
  $region9: #{self_attention_bi.1} parent=0 // pred_fallthru
    _
  // Predicated region
  $region10: #{self_attention_bi.1} parent=0 // pred_check
    _
  $region11: #{self_attention_bi.1} parent=0 // pred_check_branch
    %13 = sbr.rel (0) target = $region13
  $region12: #{self_attention_bi.1} parent=0 // pred_region
    _
  $region13: #{self_attention_bi.1} parent=0 // pred_fallthru
    _
  %v14 = vld [vmem:[%s0] sm:$0xff]
  %v15 = vld [vmem:[%s0 + $0x8] sm:$0xff]
  %v16 = vld [vmem:[%s0 + $0x10] sm:$0xff]
  %v17 = vld [vmem:[%s0 + $0x18] sm:$0xff]
  %v18 = vld [vmem:[%s0 + $0x20] sm:$0xff]
  %v19 = vld [vmem:[%s0 + $0x28] sm:$0xff]
  %v20 = vld [vmem:[%s0 + $0x30] sm:$0xff]
  %v21 = vld [vmem:[%s0 + $0x38] sm:$0xff]
  %v22 = vld [vmem:[%s1] sm:$0xff]
  %v23 = vld [vmem:[%s1 + $0x8] sm:$0xff]
  %v24 = vld [vmem:[%s1 + $0x10] sm:$0xff]
  %v25 = vld [vmem:[%s1 + $0x18] sm:$0xff]
  %v26 = vld [vmem:[%s1 + $0x20] sm:$0xff]
  %v27 = vld [vmem:[%s1 + $0x28] sm:$0xff]
  %v28 = vld [vmem:[%s2] sm:$0x7]
  %v30 = vlaneseq
  %v31 = vshrl.u32 %v30, 7
  %v32 = vsub.s32 0, %v31
  %v33 = vrot.slane %v28, %v32
  %v34 = vlaneseq
  %v35 = vshrl.u32 %v34, 7
  %v36 = vsub.s32 1, %v35
  %v37 = vrot.slane %v28, %v36
  %v38 = vlaneseq
  %v39 = vshrl.u32 %v38, 7
  %v40 = vsub.s32 2, %v39
  %v41 = vrot.slane %v28, %v40
  %vm45 = vcmask 130048
  %v47 = vsel %vm45, %v14, 0
  %v50 = vsel %vm45, %v15, 0
  %v53 = vsel %vm45, %v16, 0
  %v56 = vsel %vm45, %v17, 0
  %v59 = vsel %vm45, %v18, 0
  %v62 = vsel %vm45, %v19, 0
  %v65 = vsel %vm45, %v20, 0
  %v68 = vsel %vm45, %v21, 0
  %70 = vmatprep.subr.mxu0 %v23
  %71 = vmatpush1.msra.mxu0 %v22
  %72 = vmatprep.subr.mxu0 %v26
  %73 = vmatpush1.msra.mxu0 %v25
  %74 = vmatprep.subr.mxu0 0.0
  %75 = vmatpush1.msra.mxu0 0.0
  %76 = vmatprep.subr.mxu0 0.0
  %77 = vmatpush1.msra.mxu0 0.0
  %78 = vmatprep.subr.mxu0 0.0
  %79 = vmatpush1.msra.mxu0 0.0
  %80 = vmatprep.subr.mxu0 0.0
  %81 = vmatpush1.msra.mxu0 0.0
  %82 = vmatprep.subr.mxu0 0.0
  %83 = vmatpush1.msra.mxu0 0.0
  %84 = vmatprep.subr.mxu0 0.0
  %85 = vmatpush1.msra.mxu0 0.0
  %86 = vmatprep.subr.mxu0 0.0
  %87 = vmatpush1.msra.mxu0 0.0
  %88 = vmatprep.subr.mxu0 0.0
  %89 = vmatpush1.msra.mxu0 0.0
  %90 = vmatprep.subr.mxu0 0.0
  %91 = vmatpush1.msra.mxu0 0.0
  %92 = vmatprep.subr.mxu0 0.0
  %93 = vmatpush1.msra.mxu0 0.0
  %94 = vmatprep.subr.mxu0 0.0
  %95 = vmatpush1.msra.mxu0 0.0
  %96 = vmatprep.subr.mxu0 0.0
  %97 = vmatpush1.msra.mxu0 0.0
  %98 = vmatprep.subr.mxu0 0.0
  %99 = vmatpush1.msra.mxu0 0.0
  %100 = vmatprep.subr.mxu0 0.0
  %101 = vmatpush1.msra.mxu0 0.0
  %102 = vmatprep.subr.mxu0 0.0
  %103 = vmatpush1.msra.mxu0 0.0
  %104 = vmatprep.subr.mxu0 0.0
  %105 = vmatpush1.msra.mxu0 0.0
  %106 = vmatprep.subr.mxu0 0.0
  %107 = vmatpush1.msra.mxu0 0.0
  %108 = vmatprep.subr.mxu0 0.0
  %109 = vmatpush1.msra.mxu0 0.0
  %110 = vmatprep.subr.mxu0 0.0
  %111 = vmatpush1.msra.mxu0 0.0
  %112 = vmatprep.subr.mxu0 0.0
  %113 = vmatpush1.msra.mxu0 0.0
  %114 = vmatprep.subr.mxu0 0.0
  %115 = vmatpush1.msra.mxu0 0.0
  %116 = vmatprep.subr.mxu0 0.0
  %117 = vmatpush1.msra.mxu0 0.0
  %118 = vmatprep.subr.mxu0 0.0
  %119 = vmatpush1.msra.mxu0 0.0
  %120 = vmatprep.subr.mxu0 0.0
  %121 = vmatpush1.msra.mxu0 0.0
  %122 = vmatprep.subr.mxu0 0.0
  %123 = vmatpush1.msra.mxu0 0.0
  %124 = vmatprep.subr.mxu0 0.0
  %125 = vmatpush1.msra.mxu0 0.0
  %126 = vmatprep.subr.mxu0 0.0
  %127 = vmatpush1.msra.mxu0 0.0
  %128 = vmatprep.subr.mxu0 0.0
  %129 = vmatpush1.msra.mxu0 0.0
  %130 = vmatprep.subr.mxu0 0.0
  %131 = vmatpush1.msra.mxu0 0.0
  %132 = vmatprep.subr.mxu0 0.0
  %133 = vmatpush1.msra.mxu0 0.0
  %134 = vmatprep.mubr.f32.mxu0 0.0
  %135 = vmatmul.mubr.f32.gmra.mrb[0].mxu0 %v47
  %v136 = vpop.f32.mrb[0].mxu0
  %v137 = vadd.f32 %v33, %v136
  %v138 = vpop.f32.mrb[0].mxu0
  %v139 = vadd.f32 %v37, %v138
  %140 = vmatprep.mubr.f32.mxu0 0.0
  %141 = vmatmul.mubr.f32.gmra.mrb[0].mxu0 %v50
  %v142 = vpop.f32.mrb[0].mxu0
  %v143 = vadd.f32 %v33, %v142
  %v144 = vpop.f32.mrb[0].mxu0
  %v145 = vadd.f32 %v37, %v144
  %146 = vmatprep.mubr.f32.mxu0 0.0
  %147 = vmatmul.mubr.f32.gmra.mrb[0].mxu0 %v53
  %v148 = vpop.f32.mrb[0].mxu0
  %v149 = vadd.f32 %v33, %v148
  %v150 = vpop.f32.mrb[0].mxu0
  %v151 = vadd.f32 %v37, %v150
  %152 = vmatprep.mubr.f32.mxu0 0.0
  %153 = vmatmul.mubr.f32.gmra.mrb[0].mxu0 %v56
  %v154 = vpop.f32.mrb[0].mxu0
  %v155 = vadd.f32 %v33, %v154
  %v156 = vpop.f32.mrb[0].mxu0
  %v157 = vadd.f32 %v37, %v156
  %158 = vmatprep.mubr.f32.mxu0 0.0
  %159 = vmatmul.mubr.f32.gmra.mrb[0].mxu0 %v59
  %v160 = vpop.f32.mrb[0].mxu0
  %v161 = vadd.f32 %v33, %v160
  %v162 = vpop.f32.mrb[0].mxu0
  %v163 = vadd.f32 %v37, %v162
  %164 = vmatprep.mubr.f32.mxu0 0.0
  %165 = vmatmul.mubr.f32.gmra.mrb[0].mxu0 %v62
  %v166 = vpop.f32.mrb[0].mxu0
  %v167 = vadd.f32 %v33, %v166
  %v168 = vpop.f32.mrb[0].mxu0
  %v169 = vadd.f32 %v37, %v168
  %170 = vmatprep.mubr.f32.mxu0 0.0
  %171 = vmatmul.mubr.f32.gmra.mrb[0].mxu0 %v65
  %v172 = vpop.f32.mrb[0].mxu0
  %v173 = vadd.f32 %v33, %v172
  %v174 = vpop.f32.mrb[0].mxu0
  %v175 = vadd.f32 %v37, %v174
  %176 = vmatprep.mubr.f32.mxu0 0.0
  %177 = vmatmul.mubr.f32.gmra.mrb[0].mxu0 %v68
  %v178 = vpop.f32.mrb[0].mxu0
  %v179 = vadd.f32 %v33, %v178
  %v180 = vpop.f32.mrb[0].mxu0
  %v181 = vadd.f32 %v37, %v180
  %182 = vdwg.mxu0
  %183 = vmatprep.subr.mxu0 0.0
  %184 = vmatpush1.msra.mxu0 %v24
  %185 = vmatprep.subr.mxu0 0.0
  %186 = vmatpush1.msra.mxu0 %v27
  %187 = vmatprep.subr.mxu0 0.0
  %188 = vmatpush1.msra.mxu0 0.0
  %189 = vmatprep.subr.mxu0 0.0
  %190 = vmatpush1.msra.mxu0 0.0
  %191 = vmatprep.subr.mxu0 0.0
  %192 = vmatpush1.msra.mxu0 0.0
  %193 = vmatprep.subr.mxu0 0.0
  %194 = vmatpush1.msra.mxu0 0.0
  %195 = vmatprep.subr.mxu0 0.0
  %196 = vmatpush1.msra.mxu0 0.0
  %197 = vmatprep.subr.mxu0 0.0
  %198 = vmatpush1.msra.mxu0 0.0
  %199 = vmatprep.subr.mxu0 0.0
  %200 = vmatpush1.msra.mxu0 0.0
  %201 = vmatprep.subr.mxu0 0.0
  %202 = vmatpush1.msra.mxu0 0.0
  %203 = vmatprep.subr.mxu0 0.0
  %204 = vmatpush1.msra.mxu0 0.0
  %205 = vmatprep.subr.mxu0 0.0
  %206 = vmatpush1.msra.mxu0 0.0
  %207 = vmatprep.subr.mxu0 0.0
  %208 = vmatpush1.msra.mxu0 0.0
  %209 = vmatprep.subr.mxu0 0.0
  %210 = vmatpush1.msra.mxu0 0.0
  %211 = vmatprep.subr.mxu0 0.0
  %212 = vmatpush1.msra.mxu0 0.0
  %213 = vmatprep.subr.mxu0 0.0
  %214 = vmatpush1.msra.mxu0 0.0
  %215 = vmatprep.subr.mxu0 0.0
  %216 = vmatpush1.msra.mxu0 0.0
  %217 = vmatprep.subr.mxu0 0.0
  %218 = vmatpush1.msra.mxu0 0.0
  %219 = vmatprep.subr.mxu0 0.0
  %220 = vmatpush1.msra.mxu0 0.0
  %221 = vmatprep.subr.mxu0 0.0
  %222 = vmatpush1.msra.mxu0 0.0
  %223 = vmatprep.subr.mxu0 0.0
  %224 = vmatpush1.msra.mxu0 0.0
  %225 = vmatprep.subr.mxu0 0.0
  %226 = vmatpush1.msra.mxu0 0.0
  %227 = vmatprep.subr.mxu0 0.0
  %228 = vmatpush1.msra.mxu0 0.0
  %229 = vmatprep.subr.mxu0 0.0
  %230 = vmatpush1.msra.mxu0 0.0
  %231 = vmatprep.subr.mxu0 0.0
  %232 = vmatpush1.msra.mxu0 0.0
  %233 = vmatprep.subr.mxu0 0.0
  %234 = vmatpush1.msra.mxu0 0.0
  %235 = vmatprep.subr.mxu0 0.0
  %236 = vmatpush1.msra.mxu0 0.0
  %237 = vmatprep.subr.mxu0 0.0
  %238 = vmatpush1.msra.mxu0 0.0
  %239 = vmatprep.subr.mxu0 0.0
  %240 = vmatpush1.msra.mxu0 0.0
  %241 = vmatprep.subr.mxu0 0.0
  %242 = vmatpush1.msra.mxu0 0.0
  %243 = vmatprep.subr.mxu0 0.0
  %244 = vmatpush1.msra.mxu0 0.0
  %245 = vmatprep.subr.mxu0 0.0
  %246 = vmatpush1.msra.mxu0 0.0
  %247 = vmatprep.mubr.f32.mxu0 0.0
  %248 = vmatmul.mubr.f32.gmra.mrb[0].mxu0 %v47
  %v249 = vpop.f32.mrb[0].mxu0
  %v250 = vadd.f32 %v41, %v249
  %v251 = vpop.f32.mrb[0].mxu0
  %252 = vmatprep.mubr.f32.mxu0 0.0
  %253 = vmatmul.mubr.f32.gmra.mrb[0].mxu0 %v50
  %v254 = vpop.f32.mrb[0].mxu0
  %v255 = vadd.f32 %v41, %v254
  %v256 = vpop.f32.mrb[0].mxu0
  %257 = vmatprep.mubr.f32.mxu0 0.0
  %258 = vmatmul.mubr.f32.gmra.mrb[0].mxu0 %v53
  %v259 = vpop.f32.mrb[0].mxu0
  %v260 = vadd.f32 %v41, %v259
  %v261 = vpop.f32.mrb[0].mxu0
  %262 = vmatprep.mubr.f32.mxu0 0.0
  %263 = vmatmul.mubr.f32.gmra.mrb[0].mxu0 %v56
  %v264 = vpop.f32.mrb[0].mxu0
  %v265 = vadd.f32 %v41, %v264
  %v266 = vpop.f32.mrb[0].mxu0
  %267 = vmatprep.mubr.f32.mxu0 0.0
  %268 = vmatmul.mubr.f32.gmra.mrb[0].mxu0 %v59
  %v269 = vpop.f32.mrb[0].mxu0
  %v270 = vadd.f32 %v41, %v269
  %v271 = vpop.f32.mrb[0].mxu0
  %272 = vmatprep.mubr.f32.mxu0 0.0
  %273 = vmatmul.mubr.f32.gmra.mrb[0].mxu0 %v62
  %v274 = vpop.f32.mrb[0].mxu0
  %v275 = vadd.f32 %v41, %v274
  %v276 = vpop.f32.mrb[0].mxu0
  %277 = vmatprep.mubr.f32.mxu0 0.0
  %278 = vmatmul.mubr.f32.gmra.mrb[0].mxu0 %v65
  %v279 = vpop.f32.mrb[0].mxu0
  %v280 = vadd.f32 %v41, %v279
  %v281 = vpop.f32.mrb[0].mxu0
  %282 = vmatprep.mubr.f32.mxu0 0.0
  %283 = vmatmul.mubr.f32.gmra.mrb[0].mxu0 %v68
  %v284 = vpop.f32.mrb[0].mxu0
  %v285 = vadd.f32 %v41, %v284
  %v286 = vpop.f32.mrb[0].mxu0
  %287 = vdwg.mxu0
  %v288 = vsub.f32 %v137, %v161
  %v289 = vsub.f32 %v143, %v167
  %v290 = vsub.f32 %v149, %v173
  %v291 = vsub.f32 %v155, %v179
  %v292 = vmul.f32 %v288, %v139
  %v293 = vmul.f32 %v289, %v145
  %v294 = vmul.f32 %v290, %v151
  %v295 = vmul.f32 %v291, %v157
  %296 = vadd.xlane.f32.xlu0 %v292
  %v297 = vpop.xlane.xlu0 %296
  %298 = vadd.xlane.f32.xlu0 %v293
  %v299 = vpop.xlane.xlu0 %298
  %300 = vadd.xlane.f32.xlu0 %v294
  %v301 = vpop.xlane.xlu0 %300
  %302 = vadd.xlane.f32.xlu0 %v295
  %v303 = vpop.xlane.xlu0 %302
  %v304 = vand.u32 2147483647, %v297
  %v305 = vand.u32 2147483647, %v299
  %v306 = vand.u32 2147483647, %v301
  %v307 = vand.u32 2147483647, %v303
  %v308 = vsub.f32 0.0, %v304
  %v309 = vsub.f32 0.0, %v305
  %v310 = vsub.f32 0.0, %v306
  %v311 = vsub.f32 0.0, %v307
  %v312 = vmul.f32 %v308, 1.442695
  %v313 = vpow.pop %v312
  %v314 = vmul.f32 %v309, 1.442695
  %v315 = vpow.pop %v314
  %v316 = vmul.f32 %v310, 1.442695
  %v317 = vpow.pop %v316
  %v318 = vmul.f32 %v311, 1.442695
  %v319 = vpow.pop %v318
  %v320 = vadd.f32 %v313, 1.0
  %v321 = vadd.f32 %v315, 1.0
  %v322 = vadd.f32 %v317, 1.0
  %v323 = vadd.f32 %v319, 1.0
  %v324 = vrcp.pop %v320
  %v325 = vrcp.pop %v321
  %v326 = vrcp.pop %v322
  %v327 = vrcp.pop %v323
  %vm328 = vcmp.ge.f32.partialorder %v297, 0.0
  %vm329 = vcmp.ge.f32.partialorder %v299, 0.0
  %vm330 = vcmp.ge.f32.partialorder %v301, 0.0
  %vm331 = vcmp.ge.f32.partialorder %v303, 0.0
  %v332 = vmul.f32 %v313, %v324
  %v333 = vmul.f32 %v315, %v325
  %v334 = vmul.f32 %v317, %v326
  %v335 = vmul.f32 %v319, %v327
  %v336 = vsel %vm328, %v324, %v332
  %v337 = vsel %vm329, %v325, %v333
  %v338 = vsel %vm330, %v326, %v334
  %v339 = vsel %vm331, %v327, %v335
  %v340 = vmul.f32 %v288, %v163
  %v341 = vmul.f32 %v289, %v169
  %v342 = vmul.f32 %v290, %v175
  %v343 = vmul.f32 %v291, %v181
  %344 = vadd.xlane.f32.xlu0 %v340
  %v345 = vpop.xlane.xlu0 %344
  %346 = vadd.xlane.f32.xlu0 %v341
  %v347 = vpop.xlane.xlu0 %346
  %348 = vadd.xlane.f32.xlu0 %v342
  %v349 = vpop.xlane.xlu0 %348
  %350 = vadd.xlane.f32.xlu0 %v343
  %v351 = vpop.xlane.xlu0 %350
  %v352 = vand.u32 2147483647, %v345
  %v353 = vand.u32 2147483647, %v347
  %v354 = vand.u32 2147483647, %v349
  %v355 = vand.u32 2147483647, %v351
  %v356 = vsub.f32 0.0, %v352
  %v357 = vsub.f32 0.0, %v353
  %v358 = vsub.f32 0.0, %v354
  %v359 = vsub.f32 0.0, %v355
  %v360 = vmul.f32 %v356, 1.442695
  %v361 = vpow.pop %v360
  %v362 = vmul.f32 %v357, 1.442695
  %v363 = vpow.pop %v362
  %v364 = vmul.f32 %v358, 1.442695
  %v365 = vpow.pop %v364
  %v366 = vmul.f32 %v359, 1.442695
  %v367 = vpow.pop %v366
  %v368 = vadd.f32 %v361, 1.0
  %v369 = vadd.f32 %v363, 1.0
  %v370 = vadd.f32 %v365, 1.0
  %v371 = vadd.f32 %v367, 1.0
  %v372 = vrcp.pop %v368
  %v373 = vrcp.pop %v369
  %v374 = vrcp.pop %v370
  %v375 = vrcp.pop %v371
  %vm376 = vcmp.ge.f32.partialorder %v345, 0.0
  %vm377 = vcmp.ge.f32.partialorder %v347, 0.0
  %vm378 = vcmp.ge.f32.partialorder %v349, 0.0
  %vm379 = vcmp.ge.f32.partialorder %v351, 0.0
  %v380 = vmul.f32 %v361, %v372
  %v381 = vmul.f32 %v363, %v373
  %v382 = vmul.f32 %v365, %v374
  %v383 = vmul.f32 %v367, %v375
  %v384 = vsel %vm376, %v372, %v380
  %v385 = vsel %vm377, %v373, %v381
  %v386 = vsel %vm378, %v374, %v382
  %v387 = vsel %vm379, %v375, %v383
  %v388 = vsub.f32 1.0, %v336
  %v389 = vsub.f32 1.0, %v337
  %v390 = vsub.f32 1.0, %v338
  %v391 = vsub.f32 1.0, %v339
  %v392 = vsub.f32 1.0, %v384
  %v393 = vsub.f32 1.0, %v385
  %v394 = vsub.f32 1.0, %v386
  %v395 = vsub.f32 1.0, %v387
  %v396 = vmul.f32 %v336, %v250
  %v397 = vmul.f32 %v337, %v255
  %v398 = vmul.f32 %v338, %v260
  %v399 = vmul.f32 %v339, %v265
  %v400 = vmul.f32 %v384, %v270
  %v401 = vmul.f32 %v385, %v275
  %v402 = vmul.f32 %v386, %v280
  %v403 = vmul.f32 %v387, %v285
  %v404 = vadd.f32 %v396, %v400
  %v405 = vadd.f32 %v397, %v401
  %v406 = vadd.f32 %v398, %v402
  %v407 = vadd.f32 %v399, %v403
  %408 = vst [vmem:[%s3] sm:$0xff] %v404
  %409 = vst [vmem:[%s3 + $0x10] sm:$0xff] %v405
  %410 = vst [vmem:[%s3 + $0x20] sm:$0xff] %v406
  %411 = vst [vmem:[%s3 + $0x30] sm:$0xff] %v407
  %v412 = vmul.f32 %v388, %v250
  %v413 = vmul.f32 %v389, %v255
  %v414 = vmul.f32 %v390, %v260
  %v415 = vmul.f32 %v391, %v265
  %v416 = vmul.f32 %v392, %v270
  %v417 = vmul.f32 %v393, %v275
  %v418 = vmul.f32 %v394, %v280
  %v419 = vmul.f32 %v395, %v285
  %v420 = vadd.f32 %v412, %v416
  %v421 = vadd.f32 %v413, %v417
  %v422 = vadd.f32 %v414, %v418
  %v423 = vadd.f32 %v415, %v419
  %424 = vst [vmem:[%s3 + $0x8] sm:$0xff] %v420
  %425 = vst [vmem:[%s3 + $0x18] sm:$0xff] %v421
  %426 = vst [vmem:[%s3 + $0x28] sm:$0xff] %v422
  %427 = vst [vmem:[%s3 + $0x38] sm:$0xff] %v423
  // Predicated region
  $region14: #{self_attention_bi.1} parent=0 // pred_check
    _
  $region15: #{self_attention_bi.1} parent=0 // pred_check_branch
    %429 = sbr.rel (0) target = $region17
  $region16: #{self_attention_bi.1} parent=0 // pred_region
    _
  $region17: #{self_attention_bi.1} parent=0 // pred_fallthru
    _
  // Predicated region
  $region18: #{self_attention_bi.1} parent=0 // pred_check
    _
  $region19: #{self_attention_bi.1} parent=0 // pred_check_branch
    %431 = sbr.rel (0) target = $region21
  $region20: #{self_attention_bi.1} parent=0 // pred_region
    _
  $region21: #{self_attention_bi.1} parent=0 // pred_fallthru
    _

</llo_original>
